<compile_context>
chip_gen: v5e
topology: v5e:2x2
jax: 0.10.0
libtpu: 0.0.40
codegen_flags: <defaults>
</compile_context>

<pallas_src>
import functools

import jax
import jax.numpy as jnp
from jax.experimental import pallas as pl
from jax.experimental.pallas import tpu as pltpu

_EPS = 1e-5


def _withbias_ln_kernel(x_ref, w_ref, b_ref, o_ref):
    # x_ref: (1, C, T) block; normalize over the channel (sublane) axis.
    x = x_ref[0].astype(jnp.float32)                      # (C, T)
    inv_c = 1.0 / x.shape[0]
    mu = jnp.sum(x, axis=0, keepdims=True) * inv_c         # (1, T)
    ex2 = jnp.sum(x * x, axis=0, keepdims=True) * inv_c    # (1, T)  one-pass variance
    var = ex2 - mu * mu                                    # unbiased=False
    inv = jax.lax.rsqrt(var + _EPS)
    w = w_ref[...].astype(jnp.float32)                     # (C, 1)
    b = b_ref[...].astype(jnp.float32)                     # (C, 1)
    o_ref[0] = ((x - mu) * inv * w + b).astype(o_ref.dtype)


def _biasfree_ln_kernel(x_ref, w_ref, o_ref):
    # BiasFree: divide raw x by sqrt(var + eps) (var still about the mean),
    # exactly matching the PyTorch BiasFree_LayerNorm.
    x = x_ref[0].astype(jnp.float32)                       # (C, T)
    inv_c = 1.0 / x.shape[0]
    mu = jnp.sum(x, axis=0, keepdims=True) * inv_c
    ex2 = jnp.sum(x * x, axis=0, keepdims=True) * inv_c
    var = ex2 - mu * mu
    inv = jax.lax.rsqrt(var + _EPS)
    w = w_ref[...].astype(jnp.float32)                     # (C, 1)
    o_ref[0] = (x * inv * w).astype(o_ref.dtype)


def _pick_spatial_tile(hw, c, itemsize, budget_bytes=2 << 20):
    """Largest lane tile (multiple of 128) whose (C, THW) block fits ~budget."""
    cols = max(128, budget_bytes // max(1, c * itemsize))
    cols = (cols // 128) * 128
    if hw <= cols:
        return hw           # block dim == full array dim -> always legal
    return cols             # multiple of 128; partial last block handled by masking


@functools.partial(jax.jit, static_argnames=("layernorm_type",))
def layernorm_nchw(x, weight, bias=None, *, layernorm_type="WithBias"):
    """LayerNorm over the channel dim of an NCHW tensor (== to_4d(body(to_3d(x))))."""
    B, C, H, W = x.shape
    HW = H * W
    x3 = x.reshape(B, C, HW)                               # contiguous -> free reshape

    thw = _pick_spatial_tile(HW, C, jnp.dtype(x.dtype).itemsize)
    grid = (B, pl.cdiv(HW, thw))

    x_spec = pl.BlockSpec((1, C, thw), lambda b, j: (b, 0, j))
    o_spec = pl.BlockSpec((1, C, thw), lambda b, j: (b, 0, j))
    # weight / bias: whole (C, 1) array resident in VMEM for the entire launch
    p_spec = pl.BlockSpec(memory_space=pltpu.MemorySpace.VMEM)

    cparams = pltpu.CompilerParams(
        dimension_semantics=("parallel", "parallel"),      # megacore-friendly on v7x
        vmem_limit_bytes=32 * 1024 * 1024,                 # safe on v5e/v6e/v7x
    )

    w2 = weight.reshape(C, 1)
    if layernorm_type == "BiasFree":
        out3 = pl.pallas_call(
            _biasfree_ln_kernel,
            out_shape=jax.ShapeDtypeStruct((B, C, HW), x.dtype),
            grid=grid,
            in_specs=[x_spec, p_spec],
            out_specs=o_spec,
            compiler_params=cparams,
        )(x3, w2)
    else:
        b2 = bias.reshape(C, 1)
        out3 = pl.pallas_call(
            _withbias_ln_kernel,
            out_shape=jax.ShapeDtypeStruct((B, C, HW), x.dtype),
            grid=grid,
            in_specs=[x_spec, p_spec, p_spec],
            out_specs=o_spec,
            compiler_params=cparams,
        )(x3, w2, b2)

    return out3.reshape(B, C, H, W)


def _reference_layernorm_nchw(x, weight, bias=None, layernorm_type="WithBias"):
    xf = x.astype(jnp.float32)
    mu = jnp.mean(xf, axis=1, keepdims=True)
    var = jnp.var(xf, axis=1, keepdims=True)               # ddof=0 == unbiased=False
    w = weight.reshape(1, -1, 1, 1).astype(jnp.float32)
    if layernorm_type == "BiasFree":
        y = xf / jnp.sqrt(var + _EPS) * w
    else:
        b = bias.reshape(1, -1, 1, 1).astype(jnp.float32)
        y = (xf - mu) / jnp.sqrt(var + _EPS) * w + b
    return y.astype(x.dtype)


if __name__ == "__main__":
    key = jax.random.PRNGKey(0)
    k_x, k_w, k_b, k_x2 = jax.random.split(key, 4)

    # Small shapes consistent with the module (dim = 32)
    B, C, H, W = 2, 32, 16, 16
    x = jax.random.normal(k_x, (B, C, H, W), dtype=jnp.float32)
    weight = 1.0 + 0.1 * jax.random.normal(k_w, (C,), dtype=jnp.float32)
    bias = 0.1 * jax.random.normal(k_b, (C,), dtype=jnp.float32)

    # WithBias variant (default branch of LayerNorm)
    out_wb = jax.block_until_ready(
        layernorm_nchw(x, weight, bias, layernorm_type="WithBias"))
    ref_wb = _reference_layernorm_nchw(x, weight, bias, "WithBias")
    assert out_wb.shape == (B, C, H, W)
    assert jnp.max(jnp.abs(out_wb - ref_wb)) < 1e-4

    # BiasFree variant
    out_bf = jax.block_until_ready(
        layernorm_nchw(x, weight, layernorm_type="BiasFree"))
    ref_bf = _reference_layernorm_nchw(x, weight, None, "BiasFree")
    assert jnp.max(jnp.abs(out_bf - ref_bf)) < 1e-4

    # Odd spatial size (H*W not a nice power of two) to exercise full-extent blocks
    B2, C2, H2, W2 = 1, 48, 7, 9
    x2 = jax.random.normal(k_x2, (B2, C2, H2, W2), dtype=jnp.float32)
    w2 = jnp.ones((C2,), dtype=jnp.float32)
    b2 = jnp.zeros((C2,), dtype=jnp.float32)
    out2 = jax.block_until_ready(
        layernorm_nchw(x2, w2, b2, layernorm_type="WithBias"))
    ref2 = _reference_layernorm_nchw(x2, w2, b2, "WithBias")
    assert jnp.max(jnp.abs(out2 - ref2)) < 1e-4

    print("KERNEL_OK")
</pallas_src>

<mosaic_0001>
module attributes {stable_mosaic.version = 11 : i64} {
  func.func @_withbias_ln_kernel(%arg0: i32, %arg1: i32, %arg2: memref<1x32x256xf32, #tpu.memory_space<vmem>>, %arg3: memref<32x1xf32, #tpu.memory_space<vmem>>, %arg4: memref<32x1xf32, #tpu.memory_space<vmem>>, %arg5: memref<1x32x256xf32, #tpu.memory_space<vmem>>) attributes {dimension_semantics = [#tpu.dimension_semantics<parallel>, #tpu.dimension_semantics<parallel>], iteration_bounds = array<i64: 2, 1>, scalar_prefetch = 0 : i64, scratch_operands = 0 : i64, tpu.core_type = #tpu.core_type<tc>, window_params = [{transform_indices = @transform_0, window_bounds = array<i64: 1, 32, 256>}, {pipeline_mode = #tpu.pipeline_mode<synchronous>, transform_indices = @transform_1, window_bounds = array<i64: 32, 1>}, {pipeline_mode = #tpu.pipeline_mode<synchronous>, transform_indices = @transform_2, window_bounds = array<i64: 32, 1>}, {transform_indices = @transform_3, window_bounds = array<i64: 1, 32, 256>}]} {
    %c0 = arith.constant 0 : index
    %c0_0 = arith.constant 0 : index
    %c0_1 = arith.constant 0 : index
    %0 = vector.load %arg2[%c0, %c0_0, %c0_1] : memref<1x32x256xf32, #tpu.memory_space<vmem>>, vector<1x32x256xf32>
    %1 = vector.shape_cast %0 : vector<1x32x256xf32> to vector<32x256xf32>
    %cst = arith.constant dense<0.000000e+00> : vector<256xf32>
    %2 = vector.multi_reduction <add>, %1, %cst [0] : vector<32x256xf32> to vector<256xf32>
    %3 = vector.shape_cast %2 : vector<256xf32> to vector<1x256xf32>
    %cst_2 = arith.constant 3.125000e-02 : f32
    %4 = vector.broadcast %cst_2 : f32 to vector<1x256xf32>
    %5 = arith.mulf %3, %4 : vector<1x256xf32>
    %6 = arith.mulf %1, %1 : vector<32x256xf32>
    %cst_3 = arith.constant dense<0.000000e+00> : vector<256xf32>
    %7 = vector.multi_reduction <add>, %6, %cst_3 [0] : vector<32x256xf32> to vector<256xf32>
    %8 = vector.shape_cast %7 : vector<256xf32> to vector<1x256xf32>
    %cst_4 = arith.constant 3.125000e-02 : f32
    %9 = vector.broadcast %cst_4 : f32 to vector<1x256xf32>
    %10 = arith.mulf %8, %9 : vector<1x256xf32>
    %11 = arith.mulf %5, %5 : vector<1x256xf32>
    %12 = arith.subf %10, %11 : vector<1x256xf32>
    %cst_5 = arith.constant 9.99999974E-6 : f32
    %13 = vector.broadcast %cst_5 : f32 to vector<1x256xf32>
    %14 = arith.addf %12, %13 : vector<1x256xf32>
    %15 = math.rsqrt %14 : vector<1x256xf32>
    %c0_6 = arith.constant 0 : index
    %c0_7 = arith.constant 0 : index
    %16 = vector.load %arg3[%c0_6, %c0_7] : memref<32x1xf32, #tpu.memory_space<vmem>>, vector<32x1xf32>
    %c0_8 = arith.constant 0 : index
    %c0_9 = arith.constant 0 : index
    %17 = vector.load %arg4[%c0_8, %c0_9] : memref<32x1xf32, #tpu.memory_space<vmem>>, vector<32x1xf32>
    %18 = vector.broadcast %5 : vector<1x256xf32> to vector<32x256xf32>
    %19 = arith.subf %1, %18 : vector<32x256xf32>
    %20 = vector.broadcast %15 : vector<1x256xf32> to vector<32x256xf32>
    %21 = arith.mulf %19, %20 : vector<32x256xf32>
    %22 = vector.broadcast %16 : vector<32x1xf32> to vector<32x256xf32>
    %23 = arith.mulf %21, %22 : vector<32x256xf32>
    %24 = vector.broadcast %17 : vector<32x1xf32> to vector<32x256xf32>
    %25 = arith.addf %23, %24 : vector<32x256xf32>
    %c0_10 = arith.constant 0 : index
    %c0_11 = arith.constant 0 : index
    %c0_12 = arith.constant 0 : index
    %26 = vector.load %arg5[%c0_10, %c0_11, %c0_12] : memref<1x32x256xf32, #tpu.memory_space<vmem>>, vector<1x32x256xf32>
    %27 = vector.shape_cast %26 : vector<1x32x256xf32> to vector<32x256xf32>
    %28 = vector.shape_cast %25 : vector<32x256xf32> to vector<1x32x256xf32>
    tpu.vector_store %arg5[%c0_10, %c0_11, %c0_12], %28 {strides = array<i32>} : memref<1x32x256xf32, #tpu.memory_space<vmem>>, vector<1x32x256xf32>,
    return
  }
  func.func @transform_0(%arg0: i32, %arg1: i32) -> (i32, i32, i32) {
    %c0_i32 = arith.constant 0 : i32
    %c0_i32_0 = arith.constant 0 : i32
    return %arg0, %c0_i32, %arg1 : i32, i32, i32
  }
  func.func @transform_1(%arg0: i32, %arg1: i32) -> (i32, i32) {
    %c0_i32 = arith.constant 0 : i32
    %c0_i32_0 = arith.constant 0 : i32
    %c0_i32_1 = arith.constant 0 : i32
    return %c0_i32, %c0_i32_0 : i32, i32
  }
  func.func @transform_2(%arg0: i32, %arg1: i32) -> (i32, i32) {
    %c0_i32 = arith.constant 0 : i32
    %c0_i32_0 = arith.constant 0 : i32
    %c0_i32_1 = arith.constant 0 : i32
    return %c0_i32, %c0_i32_0 : i32, i32
  }
  func.func @transform_3(%arg0: i32, %arg1: i32) -> (i32, i32, i32) {
    %c0_i32 = arith.constant 0 : i32
    %c0_i32_0 = arith.constant 0 : i32
    return %arg0, %c0_i32, %arg1 : i32, i32, i32
  }
}

</mosaic_0001>

<llo_original>
// kernel: layernorm_nchw.1
$region0: #{layernorm_nchw.1}
  #allocation0 [shape = 'u32[]', space=smem, size = 0x4, offset = 0x4, fixed_abs, tag = 'smem constant byte address 0x4 - core index']
  #allocation1 [shape = 'u32[72,128]{1,0:T(1,128)}', space=vmem, size = 0x9000, scoped, tag = 'internal scratch']
  %s0 = inlined_call_operand.vmem [shape: f32[2,32,256], index: 0, kind: input, shape index: {}]
  %s1 = inlined_call_operand.vmem [shape: f32[32,1], index: 1, kind: input, shape index: {}]
  %s2 = inlined_call_operand.vmem [shape: f32[32,1], index: 2, kind: input, shape index: {}]
  %s3 = inlined_call_operand.vmem [shape: f32[2,32,256], index: 3, kind: output, shape index: {}]
  %s4 = sld [smem:[#allocation0]]
  $region45: #{layernorm_nchw.1} parent=0
    _
  %s6 = ssub.s32 1, %s4
  %s7 = scalar_select 0, %s6, %s4
  loop: start=0, step=1, limit=4
  $region2: #{layernorm_nchw.1} parent=0 // loop_pre_header
    _
  $region3: #{layernorm_nchw.1} parent=0 // loop_header
    %s9 = sphi 0, %s13
    %p10 = scmp.ge.s32.totalorder %s9, 4
    %s16 = sphi 0, %s28
    %s17 = sphi 0, %s24
    %s18 = sphi 0, %s16
    %s19 = sphi 0, %s17
    %s20 = sphi 0, %s18
    %s21 = sphi 0, %s19
    %s33 = sphi 0, %s35
    %s36 = sphi 0, %s33
    %s37 = sphi 0, %s36
    %s53 = sphi 0, %s37
    %s57 = sphi 0, %s57
    %s59 = sphi 0, %s57
    %s60 = sphi 0, %s59
    %s74 = sphi 0, %s60
    %s78 = sphi 0, %s78
    %s80 = sphi 0, %s78
    %s81 = sphi 0, %s80
    %s95 = sphi 0, %s81
    %s103 = sphi 0, %s105
    %s106 = sphi 0, %s103
    %s107 = sphi 0, %s106
    %s123 = sphi 0, %s107
  $region4: #{layernorm_nchw.1} parent=0 // loop_header_branch
    %12 = sbr.rel (%p10) target = $region8
  $region5: #{layernorm_nchw.1} parent=0 // loop_body
    %s14 = ssub.s32 %s9, 1
    %s15 = ssub.s32 %s9, 2
    %s22 = sadd.s32 1, %s17
    %p23 = scmp.ge.s32.totalorder %s22, 1
    %s24 = scalar_select %p23, 0, %s22
    %s25 = sadd.s32 1, %s16
    %s26 = scalar_select %p23, %s25, %s16
    %p27 = scmp.ge.s32.totalorder %s26, 2
    %s28 = scalar_select %p27, 0, %s26
    %s29 = ssub.s32 %s16, %s28
    %s30 = ssub.s32 %s17, %s24
    %s31 = sor.u32 %s29, %s30
    %p32 = scmp.eq.s32.totalorder %s31, 0
    %s34 = sadd.s32 %s33, 1
    %s35 = scalar_select %p32, %s33, %s34
    %p38 = pneg %p32
    %p39 = scmp.eq.s32.totalorder %s9, 1
    %p40 = por %p38, %p39
    %p41 = scmp.ne.s32.totalorder %s33, %s36
    %p42 = scmp.eq.s32.totalorder %s9, 0
    %p43 = por %p41, %p42
    %p44 = scmp.ne.s32.totalorder %s33, %s36
    %p45 = scmp.eq.s32.totalorder %s14, 1
    %p46 = por %p44, %p45
    %p47 = scmp.ne.s32.totalorder %s36, %s37
    %p48 = scmp.eq.s32.totalorder %s14, 0
    %p49 = por %p47, %p48
    %p50 = scmp.ne.s32.totalorder %s36, %s37
    %p51 = scmp.eq.s32.totalorder %s15, 1
    %p52 = por %p50, %p51
    %p54 = scmp.ne.s32.totalorder %s37, %s53
    %p55 = scmp.eq.s32.totalorder %s15, 0
    %p56 = por %p54, %p55
    %s58 = sadd.s32 %s57, 1
    %p61 = scmp.eq.s32.totalorder %s9, 1
    %p62 = scmp.ne.s32.totalorder %s57, %s59
    %p63 = scmp.eq.s32.totalorder %s9, 0
    %p64 = por %p62, %p63
    %p65 = scmp.ne.s32.totalorder %s57, %s59
    %p66 = scmp.eq.s32.totalorder %s14, 1
    %p67 = por %p65, %p66
    %p68 = scmp.ne.s32.totalorder %s59, %s60
    %p69 = scmp.eq.s32.totalorder %s14, 0
    %p70 = por %p68, %p69
    %p71 = scmp.ne.s32.totalorder %s59, %s60
    %p72 = scmp.eq.s32.totalorder %s15, 1
    %p73 = por %p71, %p72
    %p75 = scmp.ne.s32.totalorder %s60, %s74
    %p76 = scmp.eq.s32.totalorder %s15, 0
    %p77 = por %p75, %p76
    %s79 = sadd.s32 %s78, 1
    %p82 = scmp.eq.s32.totalorder %s9, 1
    %p83 = scmp.ne.s32.totalorder %s78, %s80
    %p84 = scmp.eq.s32.totalorder %s9, 0
    %p85 = por %p83, %p84
    %p86 = scmp.ne.s32.totalorder %s78, %s80
    %p87 = scmp.eq.s32.totalorder %s14, 1
    %p88 = por %p86, %p87
    %p89 = scmp.ne.s32.totalorder %s80, %s81
    %p90 = scmp.eq.s32.totalorder %s14, 0
    %p91 = por %p89, %p90
    %p92 = scmp.ne.s32.totalorder %s80, %s81
    %p93 = scmp.eq.s32.totalorder %s15, 1
    %p94 = por %p92, %p93
    %p96 = scmp.ne.s32.totalorder %s81, %s95
    %p97 = scmp.eq.s32.totalorder %s15, 0
    %p98 = por %p96, %p97
    %s99 = ssub.s32 %s16, %s28
    %s100 = ssub.s32 %s17, %s24
    %s101 = sor.u32 %s99, %s100
    %p102 = scmp.eq.s32.totalorder %s101, 0
    %s104 = sadd.s32 %s103, 1
    %s105 = scalar_select %p102, %s103, %s104
    %p108 = pneg %p102
    %p109 = scmp.eq.s32.totalorder %s9, 1
    %p110 = por %p108, %p109
    %p111 = scmp.ne.s32.totalorder %s103, %s106
    %p112 = scmp.eq.s32.totalorder %s9, 0
    %p113 = por %p111, %p112
    %p114 = scmp.ne.s32.totalorder %s103, %s106
    %p115 = scmp.eq.s32.totalorder %s14, 1
    %p116 = por %p114, %p115
    %p117 = scmp.ne.s32.totalorder %s106, %s107
    %p118 = scmp.eq.s32.totalorder %s14, 0
    %p119 = por %p117, %p118
    %p120 = scmp.ne.s32.totalorder %s106, %s107
    %p121 = scmp.eq.s32.totalorder %s15, 1
    %p122 = por %p120, %p121
    %p124 = scmp.ne.s32.totalorder %s107, %s123
    %p125 = scmp.eq.s32.totalorder %s15, 0
    %p126 = por %p124, %p125
    %p127 = scmp.le.s32.totalorder 1, %s9
    %p128 = scmp.lt.s32.totalorder %s9, 3
    %p129 = pnand %p127, %p128
    %p130 = pneg %p129
    // Predicated region
    $region9: #{layernorm_nchw.1} parent=5 // pred_check
      _
    $region10: #{layernorm_nchw.1} parent=5 // pred_check_branch
      %132 = sbr.rel (%p129) target = $region12
    $region11: #{layernorm_nchw.1} parent=5 // pred_region
      %s133 = ssub.s32 %s9, 1
      // Predicated region
      $region13: #{layernorm_nchw.1} parent=11 // pred_check
        %p134 = pneg %p70
      $region14: #{layernorm_nchw.1} parent=11 // pred_check_branch
        %136 = sbr.rel (%p134) target = $region16
      $region15: #{layernorm_nchw.1} parent=11 // pred_region
        _
      $region16: #{layernorm_nchw.1} parent=11 // pred_fallthru
        _
      // Predicated region
      $region17: #{layernorm_nchw.1} parent=11 // pred_check
        %p137 = pneg %p91
      $region18: #{layernorm_nchw.1} parent=11 // pred_check_branch
        %139 = sbr.rel (%p137) target = $region20
      $region19: #{layernorm_nchw.1} parent=11 // pred_region
        _
      $region20: #{layernorm_nchw.1} parent=11 // pred_fallthru
        _
    $region12: #{layernorm_nchw.1} parent=5 // pred_fallthru
      _
    %p140 = scmp.lt.s32.totalorder %s9, 2
    // Predicated region
    $region21: #{layernorm_nchw.1} parent=5 // pred_check
      %p141 = pneg %p140
    $region22: #{layernorm_nchw.1} parent=5 // pred_check_branch
      %143 = sbr.rel (%p141) target = $region24
    $region23: #{layernorm_nchw.1} parent=5 // pred_region
      // Predicated region
      $region25: #{layernorm_nchw.1} parent=23 // pred_check
        %p144 = pneg %p43
      $region26: #{layernorm_nchw.1} parent=23 // pred_check_branch
        %146 = sbr.rel (%p144) target = $region28
      $region27: #{layernorm_nchw.1} parent=23 // pred_region
        %s147 = smul.u32 2, %s17
        %p148 = scmp.lt.s32.totalorder %s16, 1
        %s149 = scalar_select %p148, %s16, 1
        %p150 = scmp.lt.s32.totalorder %s147, 1
        %s151 = scalar_select %p150, %s147, 1
        %s152 = smul.addr %s149, 8
        %s153 = sadd.s32 %s151, %s152
        %s154 = smul.addr %s153, 8
        %s155 = scalar_lea.vmem %s0, %s154
        %s156 = smul.u32 2, %s17
      $region28: #{layernorm_nchw.1} parent=23 // pred_fallthru
        _
    $region24: #{layernorm_nchw.1} parent=5 // pred_fallthru
      _
    %p157 = scmp.le.s32.totalorder 1, %s9
    %p158 = scmp.lt.s32.totalorder %s9, 3
    %p159 = pnand %p157, %p158
    %p160 = pneg %p159
    // Predicated region
    $region29: #{layernorm_nchw.1} parent=5 // pred_check
      _
    $region30: #{layernorm_nchw.1} parent=5 // pred_check_branch
      %162 = sbr.rel (%p159) target = $region32
    $region31: #{layernorm_nchw.1} parent=5 // pred_region
      %s163 = ssub.s32 %s9, 1
      %s164 = smul.u32 2, %s19
      %p165 = scmp.lt.s32.totalorder %s18, 1
      %s166 = scalar_select %p165, %s18, 1
      %p167 = scmp.lt.s32.totalorder %s164, 1
      %s168 = scalar_select %p167, %s164, 1
      %s169 = smul.addr %s166, 8
      %s170 = sadd.s32 %s168, %s169
      %s171 = smul.addr %s170, 8
      %s172 = scalar_lea.vmem %s0, %s171
      %p173 = pneg %p49
      %p174 = pneg %p46
      %p175 = pneg %p70
      %p176 = pneg %p67
      %p177 = pneg %p91
      %p178 = pneg %p88
      %p179 = pneg %p119
      %p180 = pneg %p116
      %s181 = smul.u32 2, %s19
      %p182 = scmp.lt.s32.totalorder %s18, 1
      %s183 = scalar_select %p182, %s18, 1
      %p184 = scmp.lt.s32.totalorder %s181, 1
      %s185 = scalar_select %p184, %s181, 1
      %s186 = smul.addr %s183, 8
      %s187 = sadd.s32 %s185, %s186
      %s188 = smul.addr %s187, 8
      %s189 = scalar_lea.vmem %s3, %s188
      %s190 = smul.u32 2, %s19
      %p191 = scmp.lt.s32.totalorder %s18, 1
      %s192 = scalar_select %p191, %s18, 1
      %p193 = scmp.lt.s32.totalorder %s190, 1
      %s194 = scalar_select %p193, %s190, 1
      %s195 = smul.addr %s192, 8
      %s196 = sadd.s32 %s194, %s195
      %s197 = smul.addr %s196, 8
      %s198 = scalar_lea.vmem %s0, %s197
      %s199 = smul.u32 2, %s19
      %s200 = smul.u32 2, %s19
      %p201 = scmp.lt.s32.totalorder %s18, 1
      %s202 = scalar_select %p201, %s18, 1
      %p203 = scmp.lt.s32.totalorder %s200, 1
      %s204 = scalar_select %p203, %s200, 1
      %s205 = smul.addr %s202, 8
      %s206 = sadd.s32 %s204, %s205
      %s207 = smul.addr %s206, 8
      %s208 = scalar_lea.vmem %s3, %s207
      %s209 = smul.u32 2, %s19
      %v210 = vld [vmem:[%s198] sm:$0xff]
      %v211 = vld [vmem:[%s198 + $0x8] sm:$0xff]
      %v212 = vld [vmem:[%s198 + $0x10] sm:$0xff]
      %v213 = vld [vmem:[%s198 + $0x18] sm:$0xff]
      %v214 = vld [vmem:[%s198 + $0x20] sm:$0xff]
      %v215 = vld [vmem:[%s198 + $0x28] sm:$0xff]
      %v216 = vld [vmem:[%s198 + $0x30] sm:$0xff]
      %v217 = vld [vmem:[%s198 + $0x38] sm:$0xff]
      %v218 = vadd.f32 %v210, %v212
      %v219 = vadd.f32 %v218, %v214
      %v220 = vadd.f32 %v219, %v216
      %v221 = vrot.slane %v220, 4
      %v222 = vadd.f32 %v220, %v221
      %v223 = vrot.slane %v222, 2
      %v224 = vadd.f32 %v222, %v223
      %v225 = vrot.slane %v224, 1
      %v226 = vadd.f32 %v224, %v225
      %v227 = vadd.f32 %v211, %v213
      %v228 = vadd.f32 %v227, %v215
      %v229 = vadd.f32 %v228, %v217
      %v230 = vrot.slane %v229, 4
      %v231 = vadd.f32 %v229, %v230
      %v232 = vrot.slane %v231, 2
      %v233 = vadd.f32 %v231, %v232
      %v234 = vrot.slane %v233, 1
      %v235 = vadd.f32 %v233, %v234
      %v236 = vmul.f32 %v226, 0.03125
      %v237 = vmul.f32 %v235, 0.03125
      %v238 = vmul.f32 %v210, %v210
      %v239 = vmul.f32 %v211, %v211
      %v240 = vmul.f32 %v212, %v212
      %v241 = vmul.f32 %v213, %v213
      %v242 = vmul.f32 %v214, %v214
      %v243 = vmul.f32 %v215, %v215
      %v244 = vmul.f32 %v216, %v216
      %v245 = vmul.f32 %v217, %v217
      %v246 = vadd.f32 %v238, %v240
      %v247 = vadd.f32 %v246, %v242
      %v248 = vadd.f32 %v247, %v244
      %v249 = vrot.slane %v248, 4
      %v250 = vadd.f32 %v248, %v249
      %v251 = vrot.slane %v250, 2
      %v252 = vadd.f32 %v250, %v251
      %v253 = vrot.slane %v252, 1
      %v254 = vadd.f32 %v252, %v253
      %v255 = vadd.f32 %v239, %v241
      %v256 = vadd.f32 %v255, %v243
      %v257 = vadd.f32 %v256, %v245
      %v258 = vrot.slane %v257, 4
      %v259 = vadd.f32 %v257, %v258
      %v260 = vrot.slane %v259, 2
      %v261 = vadd.f32 %v259, %v260
      %v262 = vrot.slane %v261, 1
      %v263 = vadd.f32 %v261, %v262
      %v264 = vmul.f32 %v254, 0.03125
      %v265 = vmul.f32 %v263, 0.03125
      %v266 = vmul.f32 %v236, %v236
      %v267 = vmul.f32 %v237, %v237
      %v268 = vsub.f32 %v264, %v266
      %v269 = vsub.f32 %v265, %v267
      %v270 = vadd.f32 %v268, 1e-05
      %v271 = vadd.f32 %v269, 1e-05
      %v272 = vrsqrt.pop %v270
      %v273 = vmul.f32 %v272, %v270
      %v274 = vmul.f32 %v273, %v272
      %v275 = vmul.f32 0.5, %v274
      %v276 = vsub.f32 1.5, %v275
      %v277 = vmul.f32 %v272, %v276
      %vm278 = vweird.f32 %v270
      %vm279 = vweird.f32 %v272
      %vm280 = vmor %vm278, %vm279
      %v281 = vsel %vm280, %v272, %v277
      %v282 = vrsqrt.pop %v271
      %v283 = vmul.f32 %v282, %v271
      %v284 = vmul.f32 %v283, %v282
      %v285 = vmul.f32 0.5, %v284
      %v286 = vsub.f32 1.5, %v285
      %v287 = vmul.f32 %v282, %v286
      %vm288 = vweird.f32 %v271
      %vm289 = vweird.f32 %v282
      %vm290 = vmor %vm288, %vm289
      %v291 = vsel %vm290, %v282, %v287
      %v292 = vld [vmem:[%s1] sm:$0xff]
      %v293 = vld [vmem:[%s1 + $0x8] sm:$0xff]
      %v294 = vld [vmem:[%s1 + $0x10] sm:$0xff]
      %v295 = vld [vmem:[%s1 + $0x18] sm:$0xff]
      %v296 = vld [vmem:[%s2] sm:$0xff]
      %v297 = vld [vmem:[%s2 + $0x8] sm:$0xff]
      %v298 = vld [vmem:[%s2 + $0x10] sm:$0xff]
      %v299 = vld [vmem:[%s2 + $0x18] sm:$0xff]
      %v300 = vsub.f32 %v210, %v236
      %v301 = vsub.f32 %v211, %v237
      %v302 = vsub.f32 %v212, %v236
      %v303 = vsub.f32 %v213, %v237
      %v304 = vsub.f32 %v214, %v236
      %v305 = vsub.f32 %v215, %v237
      %v306 = vsub.f32 %v216, %v236
      %v307 = vsub.f32 %v217, %v237
      %v308 = vmul.f32 %v300, %v281
      %v309 = vmul.f32 %v301, %v291
      %v310 = vmul.f32 %v302, %v281
      %v311 = vmul.f32 %v303, %v291
      %v312 = vmul.f32 %v304, %v281
      %v313 = vmul.f32 %v305, %v291
      %v314 = vmul.f32 %v306, %v281
      %v315 = vmul.f32 %v307, %v291
      %317 = vset.pattern.permute.xlu0 0
      %318 = vperm.xlu0 %317, %v292
      %v319 = vpop.permute.xlu0 %318
      %322 = vset.pattern.permute.xlu0 0
      %323 = vperm.xlu0 %322, %v293
      %v324 = vpop.permute.xlu0 %323
      %327 = vset.pattern.permute.xlu0 0
      %328 = vperm.xlu0 %327, %v294
      %v329 = vpop.permute.xlu0 %328
      %332 = vset.pattern.permute.xlu0 0
      %333 = vperm.xlu0 %332, %v295
      %v334 = vpop.permute.xlu0 %333
      %v336 = vmul.f32 %v308, %v319
      %v337 = vmul.f32 %v309, %v319
      %v338 = vmul.f32 %v310, %v324
      %v339 = vmul.f32 %v311, %v324
      %v340 = vmul.f32 %v312, %v329
      %v341 = vmul.f32 %v313, %v329
      %v342 = vmul.f32 %v314, %v334
      %v343 = vmul.f32 %v315, %v334
      %345 = vset.pattern.permute.xlu0 0
      %346 = vperm.xlu0 %345, %v296
      %v347 = vpop.permute.xlu0 %346
      %350 = vset.pattern.permute.xlu0 0
      %351 = vperm.xlu0 %350, %v297
      %v352 = vpop.permute.xlu0 %351
      %355 = vset.pattern.permute.xlu0 0
      %356 = vperm.xlu0 %355, %v298
      %v357 = vpop.permute.xlu0 %356
      %360 = vset.pattern.permute.xlu0 0
      %361 = vperm.xlu0 %360, %v299
      %v362 = vpop.permute.xlu0 %361
      %v364 = vadd.f32 %v336, %v347
      %v365 = vadd.f32 %v337, %v347
      %v366 = vadd.f32 %v338, %v352
      %v367 = vadd.f32 %v339, %v352
      %v368 = vadd.f32 %v340, %v357
      %v369 = vadd.f32 %v341, %v357
      %v370 = vadd.f32 %v342, %v362
      %v371 = vadd.f32 %v343, %v362
      %372 = vst [vmem:[%s208] sm:$0xff] %v364
      %373 = vst [vmem:[%s208 + $0x8] sm:$0xff] %v365
      %374 = vst [vmem:[%s208 + $0x10] sm:$0xff] %v366
      %375 = vst [vmem:[%s208 + $0x18] sm:$0xff] %v367
      %376 = vst [vmem:[%s208 + $0x20] sm:$0xff] %v368
      %377 = vst [vmem:[%s208 + $0x28] sm:$0xff] %v369
      %378 = vst [vmem:[%s208 + $0x30] sm:$0xff] %v370
      %379 = vst [vmem:[%s208 + $0x38] sm:$0xff] %v371
      %s380 = smul.u32 2, %s19
      %p381 = scmp.lt.s32.totalorder %s18, 1
      %s382 = scalar_select %p381, %s18, 1
      %p383 = scmp.lt.s32.totalorder %s380, 1
      %s384 = scalar_select %p383, %s380, 1
      %s385 = smul.addr %s382, 8
      %s386 = sadd.s32 %s384, %s385
      %s387 = smul.addr %s386, 8
      %s388 = scalar_lea.vmem %s3, %s387
      // Predicated region
      $region33: #{layernorm_nchw.1} parent=31 // pred_check
        %p389 = pneg %p116
      $region34: #{layernorm_nchw.1} parent=31 // pred_check_branch
        %391 = sbr.rel (%p389) target = $region36
      $region35: #{layernorm_nchw.1} parent=31 // pred_region
        %s392 = smul.u32 2, %s19
      $region36: #{layernorm_nchw.1} parent=31 // pred_fallthru
        _
    $region32: #{layernorm_nchw.1} parent=5 // pred_fallthru
      _
    %p393 = scmp.le.s32.totalorder 2, %s9
    // Predicated region
    $region37: #{layernorm_nchw.1} parent=5 // pred_check
      %p394 = pneg %p393
    $region38: #{layernorm_nchw.1} parent=5 // pred_check_branch
      %396 = sbr.rel (%p394) target = $region40
    $region39: #{layernorm_nchw.1} parent=5 // pred_region
      %s397 = ssub.s32 %s9, 2
      // Predicated region
      $region41: #{layernorm_nchw.1} parent=39 // pred_check
        %p398 = pneg %p122
      $region42: #{layernorm_nchw.1} parent=39 // pred_check_branch
        %400 = sbr.rel (%p398) target = $region44
      $region43: #{layernorm_nchw.1} parent=39 // pred_region
        %s401 = smul.u32 2, %s21
        %p402 = scmp.lt.s32.totalorder %s20, 1
        %s403 = scalar_select %p402, %s20, 1
        %p404 = scmp.lt.s32.totalorder %s401, 1
        %s405 = scalar_select %p404, %s401, 1
        %s406 = smul.addr %s403, 8
        %s407 = sadd.s32 %s405, %s406
        %s408 = smul.addr %s407, 8
        %s409 = scalar_lea.vmem %s3, %s408
      $region44: #{layernorm_nchw.1} parent=39 // pred_fallthru
        _
    $region40: #{layernorm_nchw.1} parent=5 // pred_fallthru
      _
  $region6: #{layernorm_nchw.1} parent=0 // loop_footer
    %s13 = sadd.s32 1, %s9
  $region7: #{layernorm_nchw.1} parent=0 // loop_footer_branch
    %8 = sbr.rel target = $region3
  $region8: #{layernorm_nchw.1} parent=0 // loop_exit
    _

</llo_original>
